<compile_context>
chip_gen: v7x
topology: tpu7x:2x2x1
jax: 0.10.0
libtpu: 0.0.40
codegen_flags: <defaults>
</compile_context>

<pallas_src>
import jax
import jax.numpy as jnp
from jax import lax
from jax.experimental import pallas as pl
from jax.experimental.pallas import tpu as pltpu

LAYERS = 10                 # matches maxpool(layer=10); `channels` unused in forward
_PAD = LAYERS               # effective one-sided padding of the fused pool
_WIN = 2 * LAYERS + 1       # effective window: 21x21


# --------------------------------------------------------------------------- #
# Kernel                                                                      #
# --------------------------------------------------------------------------- #
def _sliding_max21(xp, axis):
    """21-tap sliding max along `axis` of an array already padded with _PAD
    -inf entries on BOTH sides along that axis.

    Two-level 3x7 decomposition (one materialized intermediate instead of the
    4-5 temps of the log-doubling chain):
        m3[k] = max(xp[k], xp[k+1], xp[k+2])
        y[i]  = max_{t in {0,3,6,9,12,15,18}} m3[i + t]  =  max xp[i .. i+20]
    Output is 2*_PAD shorter along `axis` (back to the original extent).
    """
    n_p = xp.shape[axis]
    n = n_p - 2 * _PAD

    def sl(a, start, size):
        return lax.slice_in_dim(a, start, start + size, axis=axis)

    m3_len = n_p - 2
    m3 = jnp.maximum(jnp.maximum(sl(xp, 0, m3_len), sl(xp, 1, m3_len)),
                     sl(xp, 2, m3_len))
    y = sl(m3, 0, n)
    for t in range(3, _WIN - 2, 3):           # 3, 6, 9, 12, 15, 18
        y = jnp.maximum(y, sl(m3, t, n))
    return y


def _maxpool_fused_kernel(x_ref, o_ref):
    # Block layout: (bb, H, W) -- W on lanes, H on sublanes, bb leading.
    x = x_ref[...]
    # W pass (lane axis): pad only this axis.
    xw = jnp.pad(x, ((0, 0), (0, 0), (_PAD, _PAD)), constant_values=-jnp.inf)
    y = _sliding_max21(xw, axis=2)            # (bb, H, W)
    # H pass (sublane axis).
    yh = jnp.pad(y, ((0, 0), (_PAD, _PAD), (0, 0)), constant_values=-jnp.inf)
    o_ref[...] = _sliding_max21(yh, axis=1)   # (bb, H, W)


# --------------------------------------------------------------------------- #
# Wrapper / tiling heuristics                                                 #
# --------------------------------------------------------------------------- #
def _vmem_capacity_bytes():
    try:
        return int(pltpu.get_tpu_info().vmem_capacity_bytes)
    except Exception:
        return 64 << 20     # conservative fallback (v7x per-TensorCore VMEM)


def _divisors(n):
    ds, i = set(), 1
    while i * i <= n:
        if n % i == 0:
            ds.add(i)
            ds.add(n // i)
        i += 1
    return sorted(ds)


def _per_step_bytes(bb, h, w, itemsize):
    blk = bb * h * w * itemsize
    halo = bb * itemsize * (h * (w + 2 * _PAD) + (h + 2 * _PAD) * w)
    return 4 * blk + 3 * halo   # double-buffered in+out + live halo'd temps


def _choose_bb(b, h, w, itemsize, budget):
    """Largest exact divisor of b whose per-step VMEM estimate fits `budget`,
    capped so the 1-D grid keeps >= min(4, b) parallel steps (overlap on all
    chips + both v7x TensorCores).  Exact divisors avoid partial edge blocks
    and any HBM-side padding of the batch axis."""
    cap = max(1, b // min(4, b))
    feasible = [d for d in _divisors(b)
                if d <= cap and _per_step_bytes(d, h, w, itemsize) <= budget]
    if not feasible:
        return 1, _per_step_bytes(1, h, w, itemsize) <= budget
    return max(feasible), True


def maxpool_forward(x_nchw):
    """x_nchw: (N, C, H, W) float array -> same shape/dtype (10 fused max pools)."""
    assert jnp.issubdtype(x_nchw.dtype, jnp.floating), (
        "maxpool kernel pads with -inf and requires a floating dtype")
    n, c, h, w = x_nchw.shape
    b = n * c
    itemsize = jnp.dtype(x_nchw.dtype).itemsize

    cap = _vmem_capacity_bytes()
    vmem_limit = min(int(cap * 0.75), 100 << 20)
    budget = max(8 << 20, int(vmem_limit * 0.7))
    bb, fits = _choose_bb(b, h, w, itemsize, budget)
    if not fits:
        # Even a single plane (+ halo temps) exceeds the conservative budget:
        # raise the scoped limit as far as reasonable and proceed explicitly
        # (do not fail silently at k=1).
        vmem_limit = min(int(cap * 0.9), 120 << 20)
        # TODO(synk): spatial (H) tiling with a 2*_PAD-row halo (manual
        # make_async_copy into an -inf-prefilled VMEM scratch) for planes too
        # large to hold a full (1, H, W) slab + temps in VMEM (hits v7x first).
    grid = b // bb

    x_bhw = x_nchw.reshape(b, h, w)          # metadata only; no HBM traffic
    out_bhw = pl.pallas_call(
        _maxpool_fused_kernel,
        out_shape=jax.ShapeDtypeStruct((b, h, w), x_nchw.dtype),
        grid_spec=pltpu.PrefetchScalarGridSpec(
            num_scalar_prefetch=0,
            grid=(grid,),
            # Last two block dims equal the full (H, W) extents, so the
            # (8, 128) divisibility rule is satisfied for any H, W.
            in_specs=[pl.BlockSpec((bb, h, w), lambda i: (i, 0, 0))],
            out_specs=pl.BlockSpec((bb, h, w), lambda i: (i, 0, 0)),
        ),
        compiler_params=pltpu.CompilerParams(
            dimension_semantics=("parallel",),
            vmem_limit_bytes=vmem_limit,
        ),
    )(x_bhw)
    return out_bhw.reshape(n, c, h, w)


# --------------------------------------------------------------------------- #
# Reference + self-check                                                      #
# --------------------------------------------------------------------------- #
def _reference(x_nchw):
    """Pure-JAX reference: 10 chained 3x3/stride-1/pad-1 max pools."""
    y = x_nchw
    for _ in range(LAYERS):
        y = lax.reduce_window(
            y, -jnp.inf, lax.max,
            window_dimensions=(1, 1, 3, 3),
            window_strides=(1, 1, 1, 1),
            padding=((0, 0), (0, 0), (1, 1), (1, 1)),
        )
    return y


if __name__ == "__main__":
    key = jax.random.PRNGKey(0)
    # (2, 4, 16, 16): small case, B=8 -> bb=2, 4 parallel grid steps.
    # (2, 96, 16, 16): larger batch*channel axis, multi-plane blocks.
    shapes = [(2, 4, 16, 16), (2, 96, 16, 16)]
    for i, shp in enumerate(shapes):
        x = jax.random.normal(jax.random.fold_in(key, i), shp, dtype=jnp.float32)
        y = jax.block_until_ready(maxpool_forward(x))
        y_ref = _reference(x)
        assert y.shape == x.shape and y.dtype == x.dtype
        assert jnp.allclose(y, y_ref), f"Pallas output mismatch vs reference for {shp}"
    print("KERNEL_OK")
</pallas_src>

<mosaic_0001>
module attributes {stable_mosaic.version = 11 : i64} {
  func.func @_maxpool_fused_kernel(%arg0: i32, %arg1: memref<2x16x16xf32, #tpu.memory_space<vmem>>, %arg2: memref<2x16x16xf32, #tpu.memory_space<vmem>>) attributes {dimension_semantics = [#tpu.dimension_semantics<parallel>], iteration_bounds = array<i64: 4>, scalar_prefetch = 0 : i64, scratch_operands = 0 : i64, tpu.core_type = #tpu.core_type<tc>, window_params = [{transform_indices = @transform_0, window_bounds = array<i64: 2, 16, 16>}, {transform_indices = @transform_1, window_bounds = array<i64: 2, 16, 16>}]} {
    %c0 = arith.constant 0 : index
    %c0_0 = arith.constant 0 : index
    %c0_1 = arith.constant 0 : index
    %0 = vector.load %arg1[%c0, %c0_0, %c0_1] : memref<2x16x16xf32, #tpu.memory_space<vmem>>, vector<2x16x16xf32>
    %cst = arith.constant 0xFF800000 : f32
    %1 = vector.broadcast %cst : f32 to vector<2x16x10xf32>
    %2 = tpu.concatenate %1, %0 in 2 : vector<2x16x10xf32>, vector<2x16x16xf32> -> vector<2x16x26xf32>
    %3 = vector.broadcast %cst : f32 to vector<2x16x10xf32>
    %4 = tpu.concatenate %2, %3 in 2 : vector<2x16x26xf32>, vector<2x16x10xf32> -> vector<2x16x36xf32>
    %5 = vector.extract_strided_slice %4 {offsets = [0, 0, 0], sizes = [2, 16, 34], strides = [1, 1, 1]} : vector<2x16x36xf32> to vector<2x16x34xf32>
    %6 = vector.extract_strided_slice %4 {offsets = [0, 0, 1], sizes = [2, 16, 34], strides = [1, 1, 1]} : vector<2x16x36xf32> to vector<2x16x34xf32>
    %7 = arith.maximumf %5, %6 : vector<2x16x34xf32>
    %8 = vector.extract_strided_slice %4 {offsets = [0, 0, 2], sizes = [2, 16, 34], strides = [1, 1, 1]} : vector<2x16x36xf32> to vector<2x16x34xf32>
    %9 = arith.maximumf %7, %8 : vector<2x16x34xf32>
    %10 = vector.extract_strided_slice %9 {offsets = [0, 0, 0], sizes = [2, 16, 16], strides = [1, 1, 1]} : vector<2x16x34xf32> to vector<2x16x16xf32>
    %11 = vector.extract_strided_slice %9 {offsets = [0, 0, 3], sizes = [2, 16, 16], strides = [1, 1, 1]} : vector<2x16x34xf32> to vector<2x16x16xf32>
    %12 = arith.maximumf %10, %11 : vector<2x16x16xf32>
    %13 = vector.extract_strided_slice %9 {offsets = [0, 0, 6], sizes = [2, 16, 16], strides = [1, 1, 1]} : vector<2x16x34xf32> to vector<2x16x16xf32>
    %14 = arith.maximumf %12, %13 : vector<2x16x16xf32>
    %15 = vector.extract_strided_slice %9 {offsets = [0, 0, 9], sizes = [2, 16, 16], strides = [1, 1, 1]} : vector<2x16x34xf32> to vector<2x16x16xf32>
    %16 = arith.maximumf %14, %15 : vector<2x16x16xf32>
    %17 = vector.extract_strided_slice %9 {offsets = [0, 0, 12], sizes = [2, 16, 16], strides = [1, 1, 1]} : vector<2x16x34xf32> to vector<2x16x16xf32>
    %18 = arith.maximumf %16, %17 : vector<2x16x16xf32>
    %19 = vector.extract_strided_slice %9 {offsets = [0, 0, 15], sizes = [2, 16, 16], strides = [1, 1, 1]} : vector<2x16x34xf32> to vector<2x16x16xf32>
    %20 = arith.maximumf %18, %19 : vector<2x16x16xf32>
    %21 = vector.extract_strided_slice %9 {offsets = [0, 0, 18], sizes = [2, 16, 16], strides = [1, 1, 1]} : vector<2x16x34xf32> to vector<2x16x16xf32>
    %22 = arith.maximumf %20, %21 : vector<2x16x16xf32>
    %cst_2 = arith.constant 0xFF800000 : f32
    %23 = vector.broadcast %cst_2 : f32 to vector<2x10x16xf32>
    %24 = tpu.concatenate %23, %22 in 1 : vector<2x10x16xf32>, vector<2x16x16xf32> -> vector<2x26x16xf32>
    %25 = vector.broadcast %cst_2 : f32 to vector<2x10x16xf32>
    %26 = tpu.concatenate %24, %25 in 1 : vector<2x26x16xf32>, vector<2x10x16xf32> -> vector<2x36x16xf32>
    %27 = vector.extract_strided_slice %26 {offsets = [0, 0, 0], sizes = [2, 34, 16], strides = [1, 1, 1]} : vector<2x36x16xf32> to vector<2x34x16xf32>
    %28 = vector.extract_strided_slice %26 {offsets = [0, 1, 0], sizes = [2, 34, 16], strides = [1, 1, 1]} : vector<2x36x16xf32> to vector<2x34x16xf32>
    %29 = arith.maximumf %27, %28 : vector<2x34x16xf32>
    %30 = vector.extract_strided_slice %26 {offsets = [0, 2, 0], sizes = [2, 34, 16], strides = [1, 1, 1]} : vector<2x36x16xf32> to vector<2x34x16xf32>
    %31 = arith.maximumf %29, %30 : vector<2x34x16xf32>
    %32 = vector.extract_strided_slice %31 {offsets = [0, 0, 0], sizes = [2, 16, 16], strides = [1, 1, 1]} : vector<2x34x16xf32> to vector<2x16x16xf32>
    %33 = vector.extract_strided_slice %31 {offsets = [0, 3, 0], sizes = [2, 16, 16], strides = [1, 1, 1]} : vector<2x34x16xf32> to vector<2x16x16xf32>
    %34 = arith.maximumf %32, %33 : vector<2x16x16xf32>
    %35 = vector.extract_strided_slice %31 {offsets = [0, 6, 0], sizes = [2, 16, 16], strides = [1, 1, 1]} : vector<2x34x16xf32> to vector<2x16x16xf32>
    %36 = arith.maximumf %34, %35 : vector<2x16x16xf32>
    %37 = vector.extract_strided_slice %31 {offsets = [0, 9, 0], sizes = [2, 16, 16], strides = [1, 1, 1]} : vector<2x34x16xf32> to vector<2x16x16xf32>
    %38 = arith.maximumf %36, %37 : vector<2x16x16xf32>
    %39 = vector.extract_strided_slice %31 {offsets = [0, 12, 0], sizes = [2, 16, 16], strides = [1, 1, 1]} : vector<2x34x16xf32> to vector<2x16x16xf32>
    %40 = arith.maximumf %38, %39 : vector<2x16x16xf32>
    %41 = vector.extract_strided_slice %31 {offsets = [0, 15, 0], sizes = [2, 16, 16], strides = [1, 1, 1]} : vector<2x34x16xf32> to vector<2x16x16xf32>
    %42 = arith.maximumf %40, %41 : vector<2x16x16xf32>
    %43 = vector.extract_strided_slice %31 {offsets = [0, 18, 0], sizes = [2, 16, 16], strides = [1, 1, 1]} : vector<2x34x16xf32> to vector<2x16x16xf32>
    %44 = arith.maximumf %42, %43 : vector<2x16x16xf32>
    %c0_3 = arith.constant 0 : index
    %c0_4 = arith.constant 0 : index
    %c0_5 = arith.constant 0 : index
    %45 = vector.load %arg2[%c0_3, %c0_4, %c0_5] : memref<2x16x16xf32, #tpu.memory_space<vmem>>, vector<2x16x16xf32>
    tpu.vector_store %arg2[%c0_3, %c0_4, %c0_5], %44 {strides = array<i32>} : memref<2x16x16xf32, #tpu.memory_space<vmem>>, vector<2x16x16xf32>,
    return
  }
  func.func @transform_0(%arg0: i32) -> (i32, i32, i32) {
    %c0_i32 = arith.constant 0 : i32
    %c0_i32_0 = arith.constant 0 : i32
    %c0_i32_1 = arith.constant 0 : i32
    return %arg0, %c0_i32, %c0_i32_0 : i32, i32, i32
  }
  func.func @transform_1(%arg0: i32) -> (i32, i32, i32) {
    %c0_i32 = arith.constant 0 : i32
    %c0_i32_0 = arith.constant 0 : i32
    %c0_i32_1 = arith.constant 0 : i32
    return %arg0, %c0_i32, %c0_i32_0 : i32, i32, i32
  }
}

</mosaic_0001>

<llo_original>
// kernel: tpu_custom_call.1
$region0: #{tpu_custom_call.1}
  #allocation0 [shape = 'u32[]', space=smem, size = 0x4, offset = 0x4, fixed_abs, tag = 'smem constant byte address 0x4 - core index']
  #allocation1 [shape = 'u32[144,128]{1,0:T(1,128)}', space=vmem, size = 0x12000, scoped, tag = 'internal scratch']
  %s0 = inlined_call_operand.hbm [shape: f32[8,16,16], index: 0, kind: input, shape index: {}]
  %s1 = inlined_call_operand.hbm [shape: f32[8,16,16], index: 1, kind: output, shape index: {}]
  %s2 = sld [smem:[#allocation0]]
  $region41: #{tpu_custom_call.1} parent=0
    _
  %s4 = ssub.s32 1, %s2
  %s5 = scalar_select 0, %s4, %s2
  $region1: #{tpu_custom_call.1} parent=0
    #allocation2 [shape = 'u8[32768]{0}', space=vmem, size = 0x8000, scoped, tag = 'input window, operand 0']
    #allocation3 [shape = 's32[2]{0}', space=sflag, size = 0x8, scoped, tag = 'scoped memory for tpu_custom_call.1']
    #allocation4 [shape = 's32[2]{0}', space=sflag, size = 0x8, scoped, tag = 'scoped memory for tpu_custom_call.1']
    #allocation5 [shape = 'u8[32768]{0}', space=vmem, size = 0x8000, scoped, tag = 'output window, operand 0']
    %6 = vsyncpa [#allocation3], 0
    %s7 = scalar_lea.sflag [#allocation3], 1
    %8 = vsyncpa %s7, 0
    %9 = vsyncpa [#allocation4], 0
    %s10 = scalar_lea.sflag [#allocation4], 1
    %11 = vsyncpa %s10, 0
    loop: start=0, step=1, limit=6
    $region2: #{tpu_custom_call.1} parent=1 // loop_pre_header
      _
    $region3: #{tpu_custom_call.1} parent=1 // loop_header
      %s13 = sphi 0, %s17
      %p14 = scmp.ge.s32.totalorder %s13, 6
      %s23 = sphi 0, %s25
      %s26 = sphi 0, %s23
      %s27 = sphi 0, %s26
      %s43 = sphi 0, %s27
      %s49 = sphi 0, %s51
      %s52 = sphi 0, %s49
      %s53 = sphi 0, %s52
      %s69 = sphi 0, %s53
    $region4: #{tpu_custom_call.1} parent=1 // loop_header_branch
      %16 = sbr.rel (%p14) target = $region8
    $region5: #{tpu_custom_call.1} parent=1 // loop_body
      %s18 = ssub.s32 %s13, 1
      %s19 = ssub.s32 %s13, 2
      %s20 = sadd.s32 %s13, 1
      %s21 = ssub.s32 %s13, %s20
      %p22 = scmp.eq.s32.totalorder %s21, 0
      %s24 = sadd.s32 %s23, 1
      %s25 = scalar_select %p22, %s23, %s24
      %p28 = pneg %p22
      %p29 = scmp.eq.s32.totalorder %s13, 3
      %p30 = por %p28, %p29
      %p31 = scmp.ne.s32.totalorder %s23, %s26
      %p32 = scmp.eq.s32.totalorder %s13, 0
      %p33 = por %p31, %p32
      %p34 = scmp.ne.s32.totalorder %s23, %s26
      %p35 = scmp.eq.s32.totalorder %s18, 3
      %p36 = por %p34, %p35
      %p37 = scmp.ne.s32.totalorder %s26, %s27
      %p38 = scmp.eq.s32.totalorder %s18, 0
      %p39 = por %p37, %p38
      %p40 = scmp.ne.s32.totalorder %s26, %s27
      %p41 = scmp.eq.s32.totalorder %s19, 3
      %p42 = por %p40, %p41
      %p44 = scmp.ne.s32.totalorder %s27, %s43
      %p45 = scmp.eq.s32.totalorder %s19, 0
      %p46 = por %p44, %p45
      %s47 = ssub.s32 %s13, %s20
      %p48 = scmp.eq.s32.totalorder %s47, 0
      %s50 = sadd.s32 %s49, 1
      %s51 = scalar_select %p48, %s49, %s50
      %p54 = pneg %p48
      %p55 = scmp.eq.s32.totalorder %s13, 3
      %p56 = por %p54, %p55
      %p57 = scmp.ne.s32.totalorder %s49, %s52
      %p58 = scmp.eq.s32.totalorder %s13, 0
      %p59 = por %p57, %p58
      %p60 = scmp.ne.s32.totalorder %s49, %s52
      %p61 = scmp.eq.s32.totalorder %s18, 3
      %p62 = por %p60, %p61
      %p63 = scmp.ne.s32.totalorder %s52, %s53
      %p64 = scmp.eq.s32.totalorder %s18, 0
      %p65 = por %p63, %p64
      %p66 = scmp.ne.s32.totalorder %s52, %s53
      %p67 = scmp.eq.s32.totalorder %s19, 3
      %p68 = por %p66, %p67
      %p70 = scmp.ne.s32.totalorder %s53, %s69
      %p71 = scmp.eq.s32.totalorder %s19, 0
      %p72 = por %p70, %p71
      %p73 = scmp.le.s32.totalorder 1, %s13
      %p74 = scmp.lt.s32.totalorder %s13, 5
      %p75 = pnand %p73, %p74
      %p76 = pneg %p75
      // Predicated region
      $region9: #{tpu_custom_call.1} parent=5 // pred_check
        _
      $region10: #{tpu_custom_call.1} parent=5 // pred_check_branch
        %78 = sbr.rel (%p75) target = $region12
      $region11: #{tpu_custom_call.1} parent=5 // pred_region
        %s79 = ssub.s32 %s13, 1
      $region12: #{tpu_custom_call.1} parent=5 // pred_fallthru
        _
      %p80 = scmp.lt.s32.totalorder %s13, 4
      // Predicated region
      $region13: #{tpu_custom_call.1} parent=5 // pred_check
        %p81 = pneg %p80
      $region14: #{tpu_custom_call.1} parent=5 // pred_check_branch
        %83 = sbr.rel (%p81) target = $region16
      $region15: #{tpu_custom_call.1} parent=5 // pred_region
        // Predicated region
        $region17: #{tpu_custom_call.1} parent=15 // pred_check
          %p84 = pneg %p33
        $region18: #{tpu_custom_call.1} parent=15 // pred_check_branch
          %86 = sbr.rel (%p84) target = $region20
        $region19: #{tpu_custom_call.1} parent=15 // pred_region
          %s87 = sand.u32 %s23, 1
          %s88 = scalar_lea.sflag [#allocation3], %s87
          %s89 = sand.u32 %s23, 1
          %s90 = smul.addr %s89, 32
          %s91 = scalar_lea.vmem [#allocation2], %s90
          %s92 = smul.u32 2, %s13
          %s94 = ssub.s32 512, 512
          %95 = vsyncadd %s88, %s94
          %s96 = smul.addr %s92, 2
          %s97 = smul.addr %s96, 128
          %s98 = scalar_lea.hbm %s0, %s97
          %s99 = sshll.u32 %s91, 4
          %s100 = int_to_ptr.vmem [resolvable:$true] %s99
          %105 = dma.hbm_to_vmem [thread:$0]  %s98, 512, %s100, %s88, 128, 128, 8
        $region20: #{tpu_custom_call.1} parent=15 // pred_fallthru
          _
      $region16: #{tpu_custom_call.1} parent=5 // pred_fallthru
        _
      %p106 = scmp.le.s32.totalorder 1, %s13
      %p107 = scmp.lt.s32.totalorder %s13, 5
      %p108 = pnand %p106, %p107
      %p109 = pneg %p108
      // Predicated region
      $region21: #{tpu_custom_call.1} parent=5 // pred_check
        _
      $region22: #{tpu_custom_call.1} parent=5 // pred_check_branch
        %111 = sbr.rel (%p108) target = $region24
      $region23: #{tpu_custom_call.1} parent=5 // pred_region
        %s112 = ssub.s32 %s13, 1
        %s113 = sand.u32 %s26, 1
        %s114 = scalar_lea.sflag [#allocation3], %s113
        %s115 = sand.u32 %s26, 1
        %s116 = smul.addr %s115, 32
        %s117 = scalar_lea.vmem [#allocation2], %s116
        // Predicated region
        $region25: #{tpu_custom_call.1} parent=23 // pred_check
          %p118 = pneg %p39
        $region26: #{tpu_custom_call.1} parent=23 // pred_check_branch
          %120 = sbr.rel (%p118) target = $region28
        $region27: #{tpu_custom_call.1} parent=23 // pred_region
          %121 = dma.done %s114, 512
        $region28: #{tpu_custom_call.1} parent=23 // pred_fallthru
          _
        %s122 = sand.u32 %s26, 1
        %s123 = scalar_lea.sflag [#allocation3], %s122
        %s124 = sand.u32 %s26, 1
        %s125 = smul.addr %s124, 32
        %s126 = scalar_lea.vmem [#allocation2], %s125
        %p127 = pneg %p39
        %p128 = pneg %p36
        %p129 = pneg %p65
        %p130 = pneg %p62
        %s131 = sand.u32 %s52, 1
        %s132 = scalar_lea.sflag [#allocation4], %s131
        %s133 = sand.u32 %s52, 1
        %s134 = smul.addr %s133, 32
        %s135 = scalar_lea.vmem [#allocation5], %s134
        %s136 = smul.u32 2, %s18
        %s137 = smul.u32 2, %s18
        %v138 = vld [vmem:[%s117] sm:$0xff]
        %v139 = vld [vmem:[%s117 + $0x8] sm:$0xff]
        %v140 = vld [vmem:[%s117 + $0x10] sm:$0xff]
        %v141 = vld [vmem:[%s117 + $0x18] sm:$0xff]
        %146 = vrot.lane.b32.xlu0 %v138, 10
        %v147 = vpop.permute.xlu0 %146
        %148 = vrot.lane.b32.xlu0 %v139, 10
        %v149 = vpop.permute.xlu0 %148
        %150 = vrot.lane.b32.xlu0 %v140, 10
        %v151 = vpop.permute.xlu0 %150
        %152 = vrot.lane.b32.xlu0 %v141, 10
        %v153 = vpop.permute.xlu0 %152
        %vm158 = vcmask 80896
        %v159 = vsel %vm158, -inf, %v147
        %v160 = vsel %vm158, -inf, %v149
        %v161 = vsel %vm158, -inf, %v151
        %v162 = vsel %vm158, -inf, %v153
        %vm163 = vcmask 211968
        %v164 = vsel %vm163, %v159, -inf
        %v165 = vsel %vm163, %v160, -inf
        %v166 = vsel %vm163, %v161, -inf
        %v167 = vsel %vm163, %v162, -inf
        %172 = vrot.lane.b32.xlu0 %v164, 127
        %v173 = vpop.permute.xlu0 %172
        %174 = vrot.lane.b32.xlu0 %v165, 127
        %v175 = vpop.permute.xlu0 %174
        %176 = vrot.lane.b32.xlu0 %v166, 127
        %v177 = vpop.permute.xlu0 %176
        %178 = vrot.lane.b32.xlu0 %v167, 127
        %v179 = vpop.permute.xlu0 %178
        %v184 = vmax.f32 %v164, %v173
        %v185 = vmax.f32 %v165, %v175
        %v186 = vmax.f32 %v166, %v177
        %v187 = vmax.f32 %v167, %v179
        %188 = vrot.lane.b32.xlu0 %v164, 126
        %v189 = vpop.permute.xlu0 %188
        %190 = vrot.lane.b32.xlu0 %v165, 126
        %v191 = vpop.permute.xlu0 %190
        %192 = vrot.lane.b32.xlu0 %v166, 126
        %v193 = vpop.permute.xlu0 %192
        %194 = vrot.lane.b32.xlu0 %v167, 126
        %v195 = vpop.permute.xlu0 %194
        %v200 = vmax.f32 %v184, %v189
        %v201 = vmax.f32 %v185, %v191
        %v202 = vmax.f32 %v186, %v193
        %v203 = vmax.f32 %v187, %v195
        %208 = vrot.lane.b32.xlu0 %v200, 125
        %v209 = vpop.permute.xlu0 %208
        %210 = vrot.lane.b32.xlu0 %v201, 125
        %v211 = vpop.permute.xlu0 %210
        %212 = vrot.lane.b32.xlu0 %v202, 125
        %v213 = vpop.permute.xlu0 %212
        %214 = vrot.lane.b32.xlu0 %v203, 125
        %v215 = vpop.permute.xlu0 %214
        %v220 = vmax.f32 %v200, %v209
        %v221 = vmax.f32 %v201, %v211
        %v222 = vmax.f32 %v202, %v213
        %v223 = vmax.f32 %v203, %v215
        %224 = vrot.lane.b32.xlu0 %v200, 122
        %v225 = vpop.permute.xlu0 %224
        %226 = vrot.lane.b32.xlu0 %v201, 122
        %v227 = vpop.permute.xlu0 %226
        %228 = vrot.lane.b32.xlu0 %v202, 122
        %v229 = vpop.permute.xlu0 %228
        %230 = vrot.lane.b32.xlu0 %v203, 122
        %v231 = vpop.permute.xlu0 %230
        %v236 = vmax.f32 %v220, %v225
        %v237 = vmax.f32 %v221, %v227
        %v238 = vmax.f32 %v222, %v229
        %v239 = vmax.f32 %v223, %v231
        %240 = vrot.lane.b32.xlu0 %v200, 119
        %v241 = vpop.permute.xlu0 %240
        %242 = vrot.lane.b32.xlu0 %v201, 119
        %v243 = vpop.permute.xlu0 %242
        %244 = vrot.lane.b32.xlu0 %v202, 119
        %v245 = vpop.permute.xlu0 %244
        %246 = vrot.lane.b32.xlu0 %v203, 119
        %v247 = vpop.permute.xlu0 %246
        %v252 = vmax.f32 %v236, %v241
        %v253 = vmax.f32 %v237, %v243
        %v254 = vmax.f32 %v238, %v245
        %v255 = vmax.f32 %v239, %v247
        %256 = vrot.lane.b32.xlu0 %v200, 116
        %v257 = vpop.permute.xlu0 %256
        %258 = vrot.lane.b32.xlu0 %v201, 116
        %v259 = vpop.permute.xlu0 %258
        %260 = vrot.lane.b32.xlu0 %v202, 116
        %v261 = vpop.permute.xlu0 %260
        %262 = vrot.lane.b32.xlu0 %v203, 116
        %v263 = vpop.permute.xlu0 %262
        %v268 = vmax.f32 %v252, %v257
        %v269 = vmax.f32 %v253, %v259
        %v270 = vmax.f32 %v254, %v261
        %v271 = vmax.f32 %v255, %v263
        %272 = vrot.lane.b32.xlu0 %v200, 113
        %v273 = vpop.permute.xlu0 %272
        %274 = vrot.lane.b32.xlu0 %v201, 113
        %v275 = vpop.permute.xlu0 %274
        %276 = vrot.lane.b32.xlu0 %v202, 113
        %v277 = vpop.permute.xlu0 %276
        %278 = vrot.lane.b32.xlu0 %v203, 113
        %v279 = vpop.permute.xlu0 %278
        %v284 = vmax.f32 %v268, %v273
        %v285 = vmax.f32 %v269, %v275
        %v286 = vmax.f32 %v270, %v277
        %v287 = vmax.f32 %v271, %v279
        %288 = vrot.lane.b32.xlu0 %v200, 110
        %v289 = vpop.permute.xlu0 %288
        %290 = vrot.lane.b32.xlu0 %v201, 110
        %v291 = vpop.permute.xlu0 %290
        %292 = vrot.lane.b32.xlu0 %v202, 110
        %v293 = vpop.permute.xlu0 %292
        %294 = vrot.lane.b32.xlu0 %v203, 110
        %v295 = vpop.permute.xlu0 %294
        %v300 = vmax.f32 %v284, %v289
        %v301 = vmax.f32 %v285, %v291
        %v302 = vmax.f32 %v286, %v293
        %v303 = vmax.f32 %v287, %v295
        %vm308 = vcmask 1041408
        %v309 = vrot.slane %v300, 6
        %v310 = vrot.slane %v301, 6
        %v311 = vsel %vm308, %v309, %v310
        %v312 = vrot.slane %v302, 6
        %v313 = vrot.slane %v303, 6
        %v314 = vsel %vm308, %v312, %v313
        %v321 = vsel %vm308, -inf, %v309
        %v322 = vsel %vm308, -inf, %v312
        %v323 = vsel %vm308, %v310, -inf
        %v324 = vsel %vm308, %v313, -inf
        %vm330 = vcmask 1046528
        %v331 = vrot.slane -inf, 1
        %v332 = vrot.slane %v321, 1
        %v333 = vsel %vm330, %v331, %v332
        %v334 = vrot.slane %v311, 1
        %v335 = vsel %vm330, %v332, %v334
        %v336 = vrot.slane %v323, 1
        %v337 = vsel %vm330, %v334, %v336
        %v338 = vsel %vm330, %v336, %v331
        %v339 = vrot.slane %v322, 1
        %v340 = vsel %vm330, %v331, %v339
        %v341 = vrot.slane %v314, 1
        %v342 = vsel %vm330, %v339, %v341
        %v343 = vrot.slane %v324, 1
        %v344 = vsel %vm330, %v341, %v343
        %v345 = vsel %vm330, %v343, %v331
        %v355 = vmax.f32 %v321, %v335
        %v356 = vmax.f32 %v311, %v337
        %v357 = vmax.f32 %v323, %v338
        %v358 = vmax.f32 %v322, %v342
        %v359 = vmax.f32 %v314, %v344
        %v360 = vmax.f32 %v324, %v345
        %vm361 = vcmask 1045504
        %v362 = vrot.slane -inf, 2
        %v363 = vrot.slane %v321, 2
        %v364 = vsel %vm361, %v362, %v363
        %v365 = vrot.slane %v311, 2
        %v366 = vsel %vm361, %v363, %v365
        %v367 = vrot.slane %v323, 2
        %v368 = vsel %vm361, %v365, %v367
        %v369 = vsel %vm361, %v367, %v362
        %v370 = vrot.slane %v322, 2
        %v371 = vsel %vm361, %v362, %v370
        %v372 = vrot.slane %v314, 2
        %v373 = vsel %vm361, %v370, %v372
        %v374 = vrot.slane %v324, 2
        %v375 = vsel %vm361, %v372, %v374
        %v376 = vsel %vm361, %v374, %v362
        %v386 = vmax.f32 %v333, %v364
        %v387 = vmax.f32 %v355, %v366
        %v388 = vmax.f32 %v356, %v368
        %v389 = vmax.f32 %v357, %v369
        %v390 = vmax.f32 %v331, %v362
        %v391 = vmax.f32 %v340, %v371
        %v392 = vmax.f32 %v358, %v373
        %v393 = vmax.f32 %v359, %v375
        %v394 = vmax.f32 %v360, %v376
        %vm401 = vcmask 1044480
        %v402 = vrot.slane %v386, 3
        %v403 = vrot.slane %v387, 3
        %v404 = vsel %vm401, %v402, %v403
        %v405 = vrot.slane %v388, 3
        %v406 = vsel %vm401, %v403, %v405
        %v407 = vrot.slane %v391, 3
        %v408 = vrot.slane %v392, 3
        %v409 = vsel %vm401, %v407, %v408
        %v410 = vrot.slane %v393, 3
        %v411 = vsel %vm401, %v408, %v410
        %v416 = vmax.f32 %v386, %v404
        %v417 = vmax.f32 %v387, %v406
        %v418 = vmax.f32 %v391, %v409
        %v419 = vmax.f32 %v392, %v411
        %v420 = vrot.slane %v386, 6
        %v421 = vrot.slane %v387, 6
        %v422 = vsel %vm308, %v420, %v421
        %v423 = vrot.slane %v388, 6
        %v424 = vsel %vm308, %v421, %v423
        %v425 = vrot.slane %v391, 6
        %v426 = vrot.slane %v392, 6
        %v427 = vsel %vm308, %v425, %v426
        %v428 = vrot.slane %v393, 6
        %v429 = vsel %vm308, %v426, %v428
        %v434 = vmax.f32 %v416, %v422
        %v435 = vmax.f32 %v417, %v424
        %v436 = vmax.f32 %v418, %v427
        %v437 = vmax.f32 %v419, %v429
        %v440 = vrot.slane %v387, 1
        %v441 = vrot.slane %v388, 1
        %v442 = vsel %vm330, %v440, %v441
        %v443 = vrot.slane %v389, 1
        %v444 = vsel %vm330, %v441, %v443
        %v445 = vrot.slane %v392, 1
        %v446 = vrot.slane %v393, 1
        %v447 = vsel %vm330, %v445, %v446
        %v448 = vrot.slane %v394, 1
        %v449 = vsel %vm330, %v446, %v448
        %v454 = vmax.f32 %v434, %v442
        %v455 = vmax.f32 %v435, %v444
        %v456 = vmax.f32 %v436, %v447
        %v457 = vmax.f32 %v437, %v449
        %vm458 = vcmask 1043456
        %v459 = vrot.slane %v387, 4
        %v460 = vrot.slane %v388, 4
        %v461 = vsel %vm458, %v459, %v460
        %v462 = vrot.slane %v389, 4
        %v463 = vsel %vm458, %v460, %v462
        %v464 = vrot.slane %v392, 4
        %v465 = vrot.slane %v393, 4
        %v466 = vsel %vm458, %v464, %v465
        %v467 = vrot.slane %v394, 4
        %v468 = vsel %vm458, %v465, %v467
        %v473 = vmax.f32 %v454, %v461
        %v474 = vmax.f32 %v455, %v463
        %v475 = vmax.f32 %v456, %v466
        %v476 = vmax.f32 %v457, %v468
        %vm477 = vcmask 1040384
        %v478 = vrot.slane %v387, 7
        %v479 = vrot.slane %v388, 7
        %v480 = vsel %vm477, %v478, %v479
        %v481 = vrot.slane %v389, 7
        %v482 = vsel %vm477, %v479, %v481
        %v483 = vrot.slane %v392, 7
        %v484 = vrot.slane %v393, 7
        %v485 = vsel %vm477, %v483, %v484
        %v486 = vrot.slane %v394, 7
        %v487 = vsel %vm477, %v484, %v486
        %v492 = vmax.f32 %v473, %v480
        %v493 = vmax.f32 %v474, %v482
        %v494 = vmax.f32 %v475, %v485
        %v495 = vmax.f32 %v476, %v487
        %v497 = vrot.slane %v388, 2
        %v498 = vrot.slane %v389, 2
        %v499 = vsel %vm361, %v497, %v498
        %v500 = vrot.slane %v390, 2
        %v501 = vsel %vm361, %v498, %v500
        %v502 = vrot.slane %v393, 2
        %v503 = vrot.slane %v394, 2
        %v504 = vsel %vm361, %v502, %v503
        %v505 = vsel %vm361, %v503, %v500
        %v510 = vmax.f32 %v492, %v499
        %v511 = vmax.f32 %v493, %v501
        %v512 = vmax.f32 %v494, %v504
        %v513 = vmax.f32 %v495, %v505
        %vm514 = vcmask 130048
        %515 = vst.msk [vmem:[%s135] sm:$0xff] %vm514, %v510
        %516 = vst.msk [vmem:[%s135 + $0x8] sm:$0xff] %vm514, %v511
        %517 = vst.msk [vmem:[%s135 + $0x10] sm:$0xff] %vm514, %v512
        %518 = vst.msk [vmem:[%s135 + $0x18] sm:$0xff] %vm514, %v513
        %s519 = sand.u32 %s52, 1
        %s520 = scalar_lea.sflag [#allocation4], %s519
        %s521 = sand.u32 %s52, 1
        %s522 = smul.addr %s521, 32
        %s523 = scalar_lea.vmem [#allocation5], %s522
        // Predicated region
        $region29: #{tpu_custom_call.1} parent=23 // pred_check
          %p524 = pneg %p62
        $region30: #{tpu_custom_call.1} parent=23 // pred_check_branch
          %526 = sbr.rel (%p524) target = $region32
        $region31: #{tpu_custom_call.1} parent=23 // pred_region
          %s527 = smul.u32 2, %s18
          %s529 = ssub.s32 512, 512
          %530 = vsyncadd %s520, %s529
          %s531 = smul.addr %s527, 2
          %s532 = smul.addr %s531, 128
          %s533 = scalar_lea.hbm %s1, %s532
          %s534 = sshll.u32 %s523, 4
          %s535 = int_to_ptr.vmem [resolvable:$true] %s534
          %540 = dma.vmem_to_hbm [thread:$0]  %s535, 512, %s533, %s520, 128, 128, 8
        $region32: #{tpu_custom_call.1} parent=23 // pred_fallthru
          _
      $region24: #{tpu_custom_call.1} parent=5 // pred_fallthru
        _
      %p541 = scmp.le.s32.totalorder 2, %s13
      // Predicated region
      $region33: #{tpu_custom_call.1} parent=5 // pred_check
        %p542 = pneg %p541
      $region34: #{tpu_custom_call.1} parent=5 // pred_check_branch
        %544 = sbr.rel (%p542) target = $region36
      $region35: #{tpu_custom_call.1} parent=5 // pred_region
        %s545 = ssub.s32 %s13, 2
        // Predicated region
        $region37: #{tpu_custom_call.1} parent=35 // pred_check
          %p546 = pneg %p68
        $region38: #{tpu_custom_call.1} parent=35 // pred_check_branch
          %548 = sbr.rel (%p546) target = $region40
        $region39: #{tpu_custom_call.1} parent=35 // pred_region
          %s549 = sand.u32 %s53, 1
          %s550 = scalar_lea.sflag [#allocation4], %s549
          %s551 = sand.u32 %s53, 1
          %s552 = smul.addr %s551, 32
          %s553 = scalar_lea.vmem [#allocation5], %s552
          %554 = dma.done %s550, 512
        $region40: #{tpu_custom_call.1} parent=35 // pred_fallthru
          _
      $region36: #{tpu_custom_call.1} parent=5 // pred_fallthru
        _
    $region6: #{tpu_custom_call.1} parent=1 // loop_footer
      %s17 = sadd.s32 1, %s13
    $region7: #{tpu_custom_call.1} parent=1 // loop_footer_branch
      %12 = sbr.rel target = $region3
    $region8: #{tpu_custom_call.1} parent=1 // loop_exit
      _
    %555 = vsyncpa [#allocation3], 1
    %s556 = scalar_lea.sflag [#allocation3], 1
    %557 = vsyncpa %s556, 1
    %558 = vsyncpa [#allocation4], 1
    %s559 = scalar_lea.sflag [#allocation4], 1
    %560 = vsyncpa %s559, 1

</llo_original>
